<compile_context>
chip_gen: v6e
topology: v6e:2x2x1
jax: 0.10.0
libtpu: 0.0.40
codegen_flags: <defaults>
</compile_context>

<pallas_src>
import functools

import jax
import jax.numpy as jnp
from jax import lax
from jax.experimental import pallas as pl
from jax.experimental.pallas import tpu as pltpu


Z_DIM = 32
W_DIM = 32
N_HIDDEN = 7          # 7x CLinear+LeakyReLU, then 1 final CLinear
RMS_EPS = 1e-6
LRELU_SLOPE = 0.2


# ------------------------------ Pallas kernel ------------------------------ #

def mapping_kernel(zt_ref, wh_ref, bh_ref, wf_ref, bf_ref, ot_ref, *,
                   n_hidden, z_dim, slope, eps):
    """Fused RMSNorm -> n_hidden x (Linear+LeakyReLU) -> Linear, batch on lanes.

    zt_ref: (Z, bm)         latent block, batch on the lane axis
    wh_ref: (Z, Lpad)       hidden weights, layer i at lanes [i*Z, (i+1)*Z),
                            each slab in (out, in) layout, pre-scaled
    bh_ref: (Z, n_hidden)   hidden biases (column i = layer i), pre-scaled, f32
    wf_ref: (W, Z)          final weight (out, in), pre-scaled
    bf_ref: (W, 1)          final bias, pre-scaled, f32
    ot_ref: (W, bm)         output block, batch on the lane axis
    """
    x = zt_ref[...].astype(jnp.float32)
    # RMS norm over the feature (sublane) axis, per batch column.
    x = x * lax.rsqrt(jnp.mean(jnp.square(x), axis=0, keepdims=True) + eps)

    # Hidden layers: statically unrolled (n_hidden is a Python int).
    for i in range(n_hidden):
        w = wh_ref[:, i * z_dim:(i + 1) * z_dim]        # (Z, Z), (out, in)
        b = bh_ref[:, i:i + 1]                          # (Z, 1)
        y = jnp.dot(w, x.astype(w.dtype),
                    preferred_element_type=jnp.float32) + b
        x = jnp.maximum(y, slope * y)                   # LeakyReLU(0.2)

    # Final projection (no activation).
    wf = wf_ref[...]
    ot_ref[...] = (jnp.dot(wf, x.astype(wf.dtype),
                           preferred_element_type=jnp.float32)
                   + bf_ref[...]).astype(ot_ref.dtype)


# ------------------------------ wrapper ------------------------------------ #

def _round_up(x, m):
    return ((x + m - 1) // m) * m


def _detect_num_tensorcores():
    """Best-effort TensorCore-per-chip detection; safe fallback = 1."""
    try:
        dev = jax.devices()[0]
        for attr in ("num_cores", "num_tensorcores"):
            v = getattr(dev, attr, None)
            if isinstance(v, int) and v > 0:
                return v
        kind = (getattr(dev, "device_kind", "") or "").lower()
        if "v7" in kind:          # v7x: 2 TensorCores per chip
            return 2
    except Exception:
        pass
    return 1


def _choose_block_b(batch, num_tc):
    """Batch (lane) tile size: big tiles, split only when >1 TC or huge batch."""
    num_tc = max(1, int(num_tc))
    # One big lane-dense block: zero extra per-step overhead (v5e/v6e default).
    if batch <= 128 or (num_tc == 1 and batch <= 1024):
        return batch
    # Multi-step grid: a non-full block's lane dim must be a multiple of 128.
    bm = _round_up(pl.cdiv(batch, num_tc), 128)
    bm = min(bm, 2048)            # 512-2048 tiles amortise per-step overhead
    return batch if bm >= batch else bm


def mapping_network(z, wh, bh, wf, bf, *, eps=RMS_EPS, slope=LRELU_SLOPE,
                    block_b=None, num_cores=None):
    """z: (B, Z); wh: (Z, Lpad); bh: (Z, L); wf: (W, Z); bf: (W, 1) -> (B, W)."""
    B, Z = z.shape
    Wd = wf.shape[0]
    n_hidden = bh.shape[1]
    assert wh.shape[0] == Z and wh.shape[1] >= n_hidden * Z
    assert wf.shape[1] == Z and bf.shape == (Wd, 1)

    if num_cores is None:
        num_cores = _detect_num_tensorcores()
    bm = int(block_b) if block_b is not None else _choose_block_b(B, num_cores)
    grid = (pl.cdiv(B, bm),)
    lpad = wh.shape[1]

    # Batch-on-lanes: transpose in the wrapper (layout plumbing, tiny arrays).
    z_t = z.astype(jnp.float32).T                       # (Z, B)

    out_t = pl.pallas_call(
        functools.partial(mapping_kernel, n_hidden=n_hidden, z_dim=Z,
                          slope=float(slope), eps=float(eps)),
        out_shape=jax.ShapeDtypeStruct((Wd, B), jnp.float32),
        grid=grid,
        in_specs=[
            pl.BlockSpec((Z, bm), lambda i: (0, i)),        # latent block
            pl.BlockSpec((Z, lpad), lambda i: (0, 0)),      # hidden W slab
            pl.BlockSpec((Z, n_hidden), lambda i: (0, 0)),  # hidden biases
            pl.BlockSpec((Wd, Z), lambda i: (0, 0)),        # final W
            pl.BlockSpec((Wd, 1), lambda i: (0, 0)),        # final bias
        ],
        out_specs=pl.BlockSpec((Wd, bm), lambda i: (0, i)),
        compiler_params=pltpu.CompilerParams(
            dimension_semantics=("parallel",)),
    )(z_t, wh, bh, wf, bf)

    return out_t.T                                          # (B, W)


# --------------------------- parameter handling ----------------------------- #

def init_params(key, z_dim=Z_DIM, w_dim=W_DIM, n_hidden=N_HIDDEN):
    """Mimic the PyTorch init: normal weights (out, in), zero biases."""
    keys = jax.random.split(key, n_hidden + 1)
    hidden = []
    for i in range(n_hidden):
        w = jax.random.normal(keys[i], (z_dim, z_dim), jnp.float32)   # (out, in)
        hidden.append({"w": w, "b": jnp.zeros((z_dim,), jnp.float32),
                       "scale": (2.0 / z_dim) ** 0.5})
    wf = jax.random.normal(keys[-1], (w_dim, z_dim), jnp.float32)     # (out, in)
    final = {"w": wf, "b": jnp.zeros((w_dim,), jnp.float32),
             "scale": (2.0 / z_dim) ** 0.5}
    return {"hidden": hidden, "final": final}


def fold_params(raw, dot_dtype=jnp.bfloat16):
    """Fold equalized-LR scale into W/b and pack into kernel layout.

    Weights are stored in `dot_dtype` (bf16 by default: MXU-native, f32
    accumulation in-kernel); biases stay f32 (elementwise adds stay f32).
    """
    z_dim = raw["hidden"][0]["w"].shape[1]
    wh_dense = jnp.concatenate([p["scale"] * p["w"] for p in raw["hidden"]],
                               axis=1)                       # (Z, n_hidden*Z)
    lpad = _round_up(wh_dense.shape[1], 128)
    wh = jnp.pad(wh_dense, ((0, 0), (0, lpad - wh_dense.shape[1]))
                 ).astype(dot_dtype)                         # (Z, Lpad)
    bh = jnp.stack([p["scale"] * p["b"] for p in raw["hidden"]],
                   axis=1).astype(jnp.float32)               # (Z, n_hidden)
    pf = raw["final"]
    wf = (pf["scale"] * pf["w"]).astype(dot_dtype)           # (W, Z)
    bf = (pf["scale"] * pf["b"]).reshape(-1, 1).astype(jnp.float32)   # (W, 1)
    return {"wh": wh, "bh": bh, "wf": wf, "bf": bf}


# ------------------------------ references ---------------------------------- #

def reference_forward(raw, z, eps=RMS_EPS, slope=LRELU_SLOPE):
    """Pure-JAX reference matching the PyTorch module exactly (f32)."""
    x = z * lax.rsqrt(jnp.mean(jnp.square(z), axis=1, keepdims=True) + eps)
    for p in raw["hidden"]:
        y = (x * p["scale"]) @ p["w"].T + p["b"] * p["scale"]
        x = jnp.where(y >= 0.0, y, slope * y)
    pf = raw["final"]
    return (x * pf["scale"]) @ pf["w"].T + pf["b"] * pf["scale"]


def folded_reference(folded, z, z_dim=Z_DIM, eps=RMS_EPS, slope=LRELU_SLOPE):
    """Pure-JAX reference using the same folded params / dot precision as the kernel."""
    n_hidden = folded["bh"].shape[1]
    x = z * lax.rsqrt(jnp.mean(jnp.square(z), axis=1, keepdims=True) + eps)
    for i in range(n_hidden):
        wk = folded["wh"][:, i * z_dim:(i + 1) * z_dim]      # (out, in)
        y = jnp.dot(x.astype(wk.dtype), wk.T,
                    preferred_element_type=jnp.float32) + folded["bh"][:, i]
        x = jnp.maximum(y, slope * y)
    wf = folded["wf"]
    return (jnp.dot(x.astype(wf.dtype), wf.T,
                    preferred_element_type=jnp.float32) + folded["bf"][:, 0])


# --------------------------------- main ------------------------------------ #

if __name__ == "__main__":
    key = jax.random.PRNGKey(0)
    pkey, zkey, zkey2 = jax.random.split(key, 3)

    raw = init_params(pkey)
    folded_f32 = fold_params(raw, dot_dtype=jnp.float32)
    folded_bf16 = fold_params(raw, dot_dtype=jnp.bfloat16)   # default perf config

    # --- small batch, f32 weights: must match exact PyTorch semantics ------- #
    B = 8
    z = jax.random.normal(zkey, (B, Z_DIM), jnp.float32)
    out32 = jax.block_until_ready(mapping_network(z, **folded_f32))
    ref = reference_forward(raw, z)
    assert out32.shape == (B, W_DIM) and out32.dtype == jnp.float32
    assert bool(jnp.all(jnp.isfinite(out32)))
    assert bool(jnp.allclose(out32, ref, rtol=5e-5, atol=5e-5)), \
        float(jnp.max(jnp.abs(out32 - ref)))

    # --- bf16-at-the-dot path vs same-precision pure-JAX reference ---------- #
    out16 = jax.block_until_ready(mapping_network(z, **folded_bf16))
    ref16 = folded_reference(folded_bf16, z)
    assert bool(jnp.all(jnp.isfinite(out16)))
    assert bool(jnp.allclose(out16, ref16, rtol=5e-3, atol=5e-3)), \
        float(jnp.max(jnp.abs(out16 - ref16)))

    # --- larger batch exercising the multi-step / 2-TensorCore grid path ---- #
    B2 = 256
    z2 = jax.random.normal(zkey2, (B2, Z_DIM), jnp.float32)
    out2 = jax.block_until_ready(mapping_network(z2, **folded_f32, num_cores=2))
    ref2 = reference_forward(raw, z2)
    assert out2.shape == (B2, W_DIM)
    assert bool(jnp.allclose(out2, ref2, rtol=5e-5, atol=5e-5)), \
        float(jnp.max(jnp.abs(out2 - ref2)))

    print("KERNEL_OK")
</pallas_src>

<mosaic_0001>
module attributes {stable_mosaic.version = 11 : i64} {
  func.func @mapping_kernel(%arg0: i32, %arg1: memref<32x8xf32, #tpu.memory_space<vmem>>, %arg2: memref<32x256xf32, #tpu.memory_space<vmem>>, %arg3: memref<32x7xf32, #tpu.memory_space<vmem>>, %arg4: memref<32x32xf32, #tpu.memory_space<vmem>>, %arg5: memref<32x1xf32, #tpu.memory_space<vmem>>, %arg6: memref<32x8xf32, #tpu.memory_space<vmem>>) attributes {dimension_semantics = [#tpu.dimension_semantics<parallel>], iteration_bounds = array<i64: 1>, scalar_prefetch = 0 : i64, scratch_operands = 0 : i64, tpu.core_type = #tpu.core_type<tc>, window_params = [{transform_indices = @transform_0, window_bounds = array<i64: 32, 8>}, {pipeline_mode = #tpu.pipeline_mode<synchronous>, transform_indices = @transform_1, window_bounds = array<i64: 32, 256>}, {pipeline_mode = #tpu.pipeline_mode<synchronous>, transform_indices = @transform_2, window_bounds = array<i64: 32, 7>}, {pipeline_mode = #tpu.pipeline_mode<synchronous>, transform_indices = @transform_3, window_bounds = array<i64: 32, 32>}, {pipeline_mode = #tpu.pipeline_mode<synchronous>, transform_indices = @transform_4, window_bounds = array<i64: 32, 1>}, {transform_indices = @transform_5, window_bounds = array<i64: 32, 8>}]} {
    %c0 = arith.constant 0 : index
    %c0_0 = arith.constant 0 : index
    %0 = vector.load %arg1[%c0, %c0_0] : memref<32x8xf32, #tpu.memory_space<vmem>>, vector<32x8xf32>
    %1 = arith.mulf %0, %0 : vector<32x8xf32>
    %cst = arith.constant dense<0.000000e+00> : vector<8xf32>
    %2 = vector.multi_reduction <add>, %1, %cst [0] : vector<32x8xf32> to vector<8xf32>
    %3 = vector.shape_cast %2 : vector<8xf32> to vector<1x8xf32>
    %cst_1 = arith.constant 3.200000e+01 : f32
    %4 = vector.broadcast %cst_1 : f32 to vector<1x8xf32>
    %5 = arith.divf %3, %4 : vector<1x8xf32>
    %cst_2 = arith.constant 9.99999997E-7 : f32
    %6 = vector.broadcast %cst_2 : f32 to vector<1x8xf32>
    %7 = arith.addf %5, %6 : vector<1x8xf32>
    %8 = math.rsqrt %7 : vector<1x8xf32>
    %9 = vector.broadcast %8 : vector<1x8xf32> to vector<32x8xf32>
    %10 = arith.mulf %0, %9 : vector<32x8xf32>
    %c0_3 = arith.constant 0 : index
    %c0_4 = arith.constant 0 : index
    %11 = vector.load %arg2[%c0_3, %c0_4] : memref<32x256xf32, #tpu.memory_space<vmem>>, vector<32x32xf32>
    %c0_5 = arith.constant 0 : index
    %c0_6 = arith.constant 0 : index
    %12 = vector.load %arg3[%c0_5, %c0_6] : memref<32x7xf32, #tpu.memory_space<vmem>>, vector<32x1xf32>
    %cst_7 = arith.constant dense<0.000000e+00> : vector<32x8xf32>
    %13 = tpu.matmul %11, %10, %cst_7 {dimension_numbers = #tpu.dot_dimension_numbers<[1], [0], [0], [1], [0, 0, 1, 1], [], []>} : vector<32x32xf32>, vector<32x8xf32>, vector<32x8xf32> -> vector<32x8xf32>
    %14 = vector.broadcast %12 : vector<32x1xf32> to vector<32x8xf32>
    %15 = arith.addf %13, %14 : vector<32x8xf32>
    %cst_8 = arith.constant 2.000000e-01 : f32
    %16 = vector.broadcast %cst_8 : f32 to vector<32x8xf32>
    %17 = arith.mulf %16, %15 : vector<32x8xf32>
    %18 = arith.maximumf %15, %17 : vector<32x8xf32>
    %c0_9 = arith.constant 0 : index
    %c32 = arith.constant 32 : index
    %19 = vector.load %arg2[%c0_9, %c32] : memref<32x256xf32, #tpu.memory_space<vmem>>, vector<32x32xf32>
    %c0_10 = arith.constant 0 : index
    %c1 = arith.constant 1 : index
    %20 = vector.load %arg3[%c0_10, %c1] : memref<32x7xf32, #tpu.memory_space<vmem>>, vector<32x1xf32>
    %cst_11 = arith.constant dense<0.000000e+00> : vector<32x8xf32>
    %21 = tpu.matmul %19, %18, %cst_11 {dimension_numbers = #tpu.dot_dimension_numbers<[1], [0], [0], [1], [0, 0, 1, 1], [], []>} : vector<32x32xf32>, vector<32x8xf32>, vector<32x8xf32> -> vector<32x8xf32>
    %22 = vector.broadcast %20 : vector<32x1xf32> to vector<32x8xf32>
    %23 = arith.addf %21, %22 : vector<32x8xf32>
    %cst_12 = arith.constant 2.000000e-01 : f32
    %24 = vector.broadcast %cst_12 : f32 to vector<32x8xf32>
    %25 = arith.mulf %24, %23 : vector<32x8xf32>
    %26 = arith.maximumf %23, %25 : vector<32x8xf32>
    %c0_13 = arith.constant 0 : index
    %c64 = arith.constant 64 : index
    %27 = vector.load %arg2[%c0_13, %c64] : memref<32x256xf32, #tpu.memory_space<vmem>>, vector<32x32xf32>
    %c0_14 = arith.constant 0 : index
    %c2 = arith.constant 2 : index
    %28 = vector.load %arg3[%c0_14, %c2] : memref<32x7xf32, #tpu.memory_space<vmem>>, vector<32x1xf32>
    %cst_15 = arith.constant dense<0.000000e+00> : vector<32x8xf32>
    %29 = tpu.matmul %27, %26, %cst_15 {dimension_numbers = #tpu.dot_dimension_numbers<[1], [0], [0], [1], [0, 0, 1, 1], [], []>} : vector<32x32xf32>, vector<32x8xf32>, vector<32x8xf32> -> vector<32x8xf32>
    %30 = vector.broadcast %28 : vector<32x1xf32> to vector<32x8xf32>
    %31 = arith.addf %29, %30 : vector<32x8xf32>
    %cst_16 = arith.constant 2.000000e-01 : f32
    %32 = vector.broadcast %cst_16 : f32 to vector<32x8xf32>
    %33 = arith.mulf %32, %31 : vector<32x8xf32>
    %34 = arith.maximumf %31, %33 : vector<32x8xf32>
    %c0_17 = arith.constant 0 : index
    %c96 = arith.constant 96 : index
    %35 = vector.load %arg2[%c0_17, %c96] : memref<32x256xf32, #tpu.memory_space<vmem>>, vector<32x32xf32>
    %c0_18 = arith.constant 0 : index
    %c3 = arith.constant 3 : index
    %36 = vector.load %arg3[%c0_18, %c3] : memref<32x7xf32, #tpu.memory_space<vmem>>, vector<32x1xf32>
    %cst_19 = arith.constant dense<0.000000e+00> : vector<32x8xf32>
    %37 = tpu.matmul %35, %34, %cst_19 {dimension_numbers = #tpu.dot_dimension_numbers<[1], [0], [0], [1], [0, 0, 1, 1], [], []>} : vector<32x32xf32>, vector<32x8xf32>, vector<32x8xf32> -> vector<32x8xf32>
    %38 = vector.broadcast %36 : vector<32x1xf32> to vector<32x8xf32>
    %39 = arith.addf %37, %38 : vector<32x8xf32>
    %cst_20 = arith.constant 2.000000e-01 : f32
    %40 = vector.broadcast %cst_20 : f32 to vector<32x8xf32>
    %41 = arith.mulf %40, %39 : vector<32x8xf32>
    %42 = arith.maximumf %39, %41 : vector<32x8xf32>
    %c0_21 = arith.constant 0 : index
    %c128 = arith.constant 128 : index
    %43 = vector.load %arg2[%c0_21, %c128] : memref<32x256xf32, #tpu.memory_space<vmem>>, vector<32x32xf32>
    %c0_22 = arith.constant 0 : index
    %c4 = arith.constant 4 : index
    %44 = vector.load %arg3[%c0_22, %c4] : memref<32x7xf32, #tpu.memory_space<vmem>>, vector<32x1xf32>
    %cst_23 = arith.constant dense<0.000000e+00> : vector<32x8xf32>
    %45 = tpu.matmul %43, %42, %cst_23 {dimension_numbers = #tpu.dot_dimension_numbers<[1], [0], [0], [1], [0, 0, 1, 1], [], []>} : vector<32x32xf32>, vector<32x8xf32>, vector<32x8xf32> -> vector<32x8xf32>
    %46 = vector.broadcast %44 : vector<32x1xf32> to vector<32x8xf32>
    %47 = arith.addf %45, %46 : vector<32x8xf32>
    %cst_24 = arith.constant 2.000000e-01 : f32
    %48 = vector.broadcast %cst_24 : f32 to vector<32x8xf32>
    %49 = arith.mulf %48, %47 : vector<32x8xf32>
    %50 = arith.maximumf %47, %49 : vector<32x8xf32>
    %c0_25 = arith.constant 0 : index
    %c160 = arith.constant 160 : index
    %51 = vector.load %arg2[%c0_25, %c160] : memref<32x256xf32, #tpu.memory_space<vmem>>, vector<32x32xf32>
    %c0_26 = arith.constant 0 : index
    %c5 = arith.constant 5 : index
    %52 = vector.load %arg3[%c0_26, %c5] : memref<32x7xf32, #tpu.memory_space<vmem>>, vector<32x1xf32>
    %cst_27 = arith.constant dense<0.000000e+00> : vector<32x8xf32>
    %53 = tpu.matmul %51, %50, %cst_27 {dimension_numbers = #tpu.dot_dimension_numbers<[1], [0], [0], [1], [0, 0, 1, 1], [], []>} : vector<32x32xf32>, vector<32x8xf32>, vector<32x8xf32> -> vector<32x8xf32>
    %54 = vector.broadcast %52 : vector<32x1xf32> to vector<32x8xf32>
    %55 = arith.addf %53, %54 : vector<32x8xf32>
    %cst_28 = arith.constant 2.000000e-01 : f32
    %56 = vector.broadcast %cst_28 : f32 to vector<32x8xf32>
    %57 = arith.mulf %56, %55 : vector<32x8xf32>
    %58 = arith.maximumf %55, %57 : vector<32x8xf32>
    %c0_29 = arith.constant 0 : index
    %c192 = arith.constant 192 : index
    %59 = vector.load %arg2[%c0_29, %c192] : memref<32x256xf32, #tpu.memory_space<vmem>>, vector<32x32xf32>
    %c0_30 = arith.constant 0 : index
    %c6 = arith.constant 6 : index
    %60 = vector.load %arg3[%c0_30, %c6] : memref<32x7xf32, #tpu.memory_space<vmem>>, vector<32x1xf32>
    %cst_31 = arith.constant dense<0.000000e+00> : vector<32x8xf32>
    %61 = tpu.matmul %59, %58, %cst_31 {dimension_numbers = #tpu.dot_dimension_numbers<[1], [0], [0], [1], [0, 0, 1, 1], [], []>} : vector<32x32xf32>, vector<32x8xf32>, vector<32x8xf32> -> vector<32x8xf32>
    %62 = vector.broadcast %60 : vector<32x1xf32> to vector<32x8xf32>
    %63 = arith.addf %61, %62 : vector<32x8xf32>
    %cst_32 = arith.constant 2.000000e-01 : f32
    %64 = vector.broadcast %cst_32 : f32 to vector<32x8xf32>
    %65 = arith.mulf %64, %63 : vector<32x8xf32>
    %66 = arith.maximumf %63, %65 : vector<32x8xf32>
    %c0_33 = arith.constant 0 : index
    %c0_34 = arith.constant 0 : index
    %67 = vector.load %arg4[%c0_33, %c0_34] : memref<32x32xf32, #tpu.memory_space<vmem>>, vector<32x32xf32>
    %cst_35 = arith.constant dense<0.000000e+00> : vector<32x8xf32>
    %68 = tpu.matmul %67, %66, %cst_35 {dimension_numbers = #tpu.dot_dimension_numbers<[1], [0], [0], [1], [0, 0, 1, 1], [], []>} : vector<32x32xf32>, vector<32x8xf32>, vector<32x8xf32> -> vector<32x8xf32>
    %c0_36 = arith.constant 0 : index
    %c0_37 = arith.constant 0 : index
    %69 = vector.load %arg5[%c0_36, %c0_37] : memref<32x1xf32, #tpu.memory_space<vmem>>, vector<32x1xf32>
    %70 = vector.broadcast %69 : vector<32x1xf32> to vector<32x8xf32>
    %71 = arith.addf %68, %70 : vector<32x8xf32>
    %c0_38 = arith.constant 0 : index
    %c0_39 = arith.constant 0 : index
    %72 = vector.load %arg6[%c0_38, %c0_39] : memref<32x8xf32, #tpu.memory_space<vmem>>, vector<32x8xf32>
    tpu.vector_store %arg6[%c0_38, %c0_39], %71 {strides = array<i32>} : memref<32x8xf32, #tpu.memory_space<vmem>>, vector<32x8xf32>,
    return
  }
  func.func @transform_0(%arg0: i32) -> (i32, i32) {
    %c0_i32 = arith.constant 0 : i32
    %c0_i32_0 = arith.constant 0 : i32
    return %c0_i32, %arg0 : i32, i32
  }
  func.func @transform_1(%arg0: i32) -> (i32, i32) {
    %c0_i32 = arith.constant 0 : i32
    %c0_i32_0 = arith.constant 0 : i32
    %c0_i32_1 = arith.constant 0 : i32
    return %c0_i32, %c0_i32_0 : i32, i32
  }
  func.func @transform_2(%arg0: i32) -> (i32, i32) {
    %c0_i32 = arith.constant 0 : i32
    %c0_i32_0 = arith.constant 0 : i32
    %c0_i32_1 = arith.constant 0 : i32
    return %c0_i32, %c0_i32_0 : i32, i32
  }
  func.func @transform_3(%arg0: i32) -> (i32, i32) {
    %c0_i32 = arith.constant 0 : i32
    %c0_i32_0 = arith.constant 0 : i32
    %c0_i32_1 = arith.constant 0 : i32
    return %c0_i32, %c0_i32_0 : i32, i32
  }
  func.func @transform_4(%arg0: i32) -> (i32, i32) {
    %c0_i32 = arith.constant 0 : i32
    %c0_i32_0 = arith.constant 0 : i32
    %c0_i32_1 = arith.constant 0 : i32
    return %c0_i32, %c0_i32_0 : i32, i32
  }
  func.func @transform_5(%arg0: i32) -> (i32, i32) {
    %c0_i32 = arith.constant 0 : i32
    %c0_i32_0 = arith.constant 0 : i32
    return %c0_i32, %arg0 : i32, i32
  }
}

</mosaic_0001>

<llo_original>
// kernel: tpu_custom_call.1
$region0: #{tpu_custom_call.1}
  #allocation0 [shape = 'u32[]', space=smem, size = 0x4, offset = 0x4, fixed_abs, tag = 'smem constant byte address 0x4 - core index']
  #allocation1 [shape = 'u32[144,128]{1,0:T(1,128)}', space=vmem, size = 0x12000, scoped, tag = 'internal scratch']
  %s0 = inlined_call_operand.vmem [shape: f32[32,8], index: 0, kind: input, shape index: {}]
  %s1 = inlined_call_operand.vmem [shape: f32[32,256], index: 1, kind: input, shape index: {}]
  %s2 = inlined_call_operand.vmem [shape: f32[32,7], index: 2, kind: input, shape index: {}]
  %s3 = inlined_call_operand.vmem [shape: f32[32,32], index: 3, kind: input, shape index: {}]
  %s4 = inlined_call_operand.vmem [shape: f32[32,1], index: 4, kind: input, shape index: {}]
  %s5 = inlined_call_operand.vmem [shape: f32[32,8], index: 5, kind: output, shape index: {}]
  %s6 = sld [smem:[#allocation0]]
  $region30: #{tpu_custom_call.1} parent=0
    _
  %s8 = ssub.s32 1, %s6
  %s9 = scalar_select 0, %s8, %s6
  // Predicated region
  $region2: #{tpu_custom_call.1} parent=0 // pred_check
    _
  $region3: #{tpu_custom_call.1} parent=0 // pred_check_branch
    %11 = sbr.rel (0) target = $region5
  $region4: #{tpu_custom_call.1} parent=0 // pred_region
    _
  $region5: #{tpu_custom_call.1} parent=0 // pred_fallthru
    _
  // Predicated region
  $region6: #{tpu_custom_call.1} parent=0 // pred_check
    _
  $region7: #{tpu_custom_call.1} parent=0 // pred_check_branch
    %13 = sbr.rel (0) target = $region9
  $region8: #{tpu_custom_call.1} parent=0 // pred_region
    _
  $region9: #{tpu_custom_call.1} parent=0 // pred_fallthru
    _
  // Predicated region
  $region10: #{tpu_custom_call.1} parent=0 // pred_check
    _
  $region11: #{tpu_custom_call.1} parent=0 // pred_check_branch
    %15 = sbr.rel (0) target = $region13
  $region12: #{tpu_custom_call.1} parent=0 // pred_region
    _
  $region13: #{tpu_custom_call.1} parent=0 // pred_fallthru
    _
  // Predicated region
  $region14: #{tpu_custom_call.1} parent=0 // pred_check
    _
  $region15: #{tpu_custom_call.1} parent=0 // pred_check_branch
    %17 = sbr.rel (0) target = $region17
  $region16: #{tpu_custom_call.1} parent=0 // pred_region
    _
  $region17: #{tpu_custom_call.1} parent=0 // pred_fallthru
    _
  // Predicated region
  $region18: #{tpu_custom_call.1} parent=0 // pred_check
    _
  $region19: #{tpu_custom_call.1} parent=0 // pred_check_branch
    %19 = sbr.rel (0) target = $region21
  $region20: #{tpu_custom_call.1} parent=0 // pred_region
    _
  $region21: #{tpu_custom_call.1} parent=0 // pred_fallthru
    _
  %v20 = vld [vmem:[%s0] sm:$0xff]
  %v21 = vld [vmem:[%s0 + $0x8] sm:$0xff]
  %v22 = vld [vmem:[%s0 + $0x10] sm:$0xff]
  %v23 = vld [vmem:[%s0 + $0x18] sm:$0xff]
  %v24 = vmul.f32 %v20, %v20
  %v25 = vmul.f32 %v21, %v21
  %v26 = vmul.f32 %v22, %v22
  %v27 = vmul.f32 %v23, %v23
  %vm28 = vcmask 64512
  %v29 = vsel %vm28, %v24, 0.0
  %v30 = vsel %vm28, %v25, 0.0
  %v31 = vadd.f32 %v29, %v30
  %v32 = vsel %vm28, %v26, 0.0
  %v33 = vadd.f32 %v31, %v32
  %v34 = vsel %vm28, %v27, 0.0
  %v35 = vadd.f32 %v33, %v34
  %v36 = vrot.slane %v35, 4
  %v37 = vadd.f32 %v35, %v36
  %v38 = vrot.slane %v37, 2
  %v39 = vadd.f32 %v37, %v38
  %v40 = vrot.slane %v39, 1
  %v41 = vadd.f32 %v39, %v40
  %v42 = vrcp.pop 32.0
  %v43 = vmul.f32 %v41, %v42
  %v44 = vadd.f32 %v43, 1e-06
  %v45 = vrsqrt.pop %v44
  %v46 = vmul.f32 %v20, %v45
  %v47 = vmul.f32 %v21, %v45
  %v48 = vmul.f32 %v22, %v45
  %v49 = vmul.f32 %v23, %v45
  %v50 = vld [vmem:[%s1] sm:$0xff]
  %v51 = vld [vmem:[%s1 + $0x10] sm:$0xff]
  %v52 = vld [vmem:[%s1 + $0x20] sm:$0xff]
  %v53 = vld [vmem:[%s1 + $0x30] sm:$0xff]
  %v54 = vld [vmem:[%s2] sm:$0xff]
  %v55 = vld [vmem:[%s2 + $0x8] sm:$0xff]
  %v56 = vld [vmem:[%s2 + $0x10] sm:$0xff]
  %v57 = vld [vmem:[%s2 + $0x18] sm:$0xff]
  %59 = vset.pattern.permute.xlu0 0
  %60 = vperm.xlu0 %59, %v54
  %v61 = vpop.permute.xlu0 %60
  %64 = vset.pattern.permute.xlu0 0
  %65 = vperm.xlu0 %64, %v55
  %v66 = vpop.permute.xlu0 %65
  %69 = vset.pattern.permute.xlu0 0
  %70 = vperm.xlu0 %69, %v56
  %v71 = vpop.permute.xlu0 %70
  %74 = vset.pattern.permute.xlu0 0
  %75 = vperm.xlu0 %74, %v57
  %v76 = vpop.permute.xlu0 %75
  %vm78 = vcmask 261120
  %v80 = vsel %vm78, %v50, 0
  %v83 = vsel %vm78, %v51, 0
  %v86 = vsel %vm78, %v52, 0
  %v89 = vsel %vm78, %v53, 0
  %91 = vmatprep.subr.mxu0 0.0
  %92 = vmatpush1.msra.mxu0 0.0
  %93 = vmatprep.subr.mxu0 0.0
  %94 = vmatpush1.msra.mxu0 0.0
  %95 = vmatprep.subr.mxu0 0.0
  %96 = vmatpush1.msra.mxu0 0.0
  %97 = vmatprep.subr.mxu0 0.0
  %98 = vmatpush1.msra.mxu0 0.0
  %99 = vmatprep.subr.mxu0 0.0
  %100 = vmatpush1.msra.mxu0 0.0
  %101 = vmatprep.subr.mxu0 0.0
  %102 = vmatpush1.msra.mxu0 0.0
  %103 = vmatprep.subr.mxu0 0.0
  %104 = vmatpush1.msra.mxu0 0.0
  %105 = vmatprep.subr.mxu0 0.0
  %106 = vmatpush1.msra.mxu0 0.0
  %107 = vmatprep.subr.mxu0 0.0
  %108 = vmatpush1.msra.mxu0 0.0
  %109 = vmatprep.subr.mxu0 0.0
  %110 = vmatpush1.msra.mxu0 0.0
  %111 = vmatprep.subr.mxu0 0.0
  %112 = vmatpush1.msra.mxu0 0.0
  %113 = vmatprep.subr.mxu0 0.0
  %114 = vmatpush1.msra.mxu0 0.0
  %115 = vmatprep.subr.mxu0 0.0
  %116 = vmatpush1.msra.mxu0 %v49
  %117 = vmatprep.subr.mxu0 0.0
  %118 = vmatpush1.msra.mxu0 %v48
  %119 = vmatprep.subr.mxu0 0.0
  %120 = vmatpush1.msra.mxu0 %v47
  %121 = vmatprep.subr.mxu0 0.0
  %122 = vmatpush1.msra.mxu0 %v46
  %123 = vmatprep.subr.mxu0 0.0
  %124 = vmatpush2.msra.mxu0 0.0
  %125 = vmatprep.subr.mxu0 0.0
  %126 = vmatpush2.msra.mxu0 0.0
  %127 = vmatprep.subr.mxu0 0.0
  %128 = vmatpush2.msra.mxu0 0.0
  %129 = vmatprep.subr.mxu0 0.0
  %130 = vmatpush2.msra.mxu0 0.0
  %131 = vmatprep.subr.mxu0 0.0
  %132 = vmatpush2.msra.mxu0 0.0
  %133 = vmatprep.subr.mxu0 0.0
  %134 = vmatpush2.msra.mxu0 0.0
  %135 = vmatprep.subr.mxu0 0.0
  %136 = vmatpush2.msra.mxu0 0.0
  %137 = vmatprep.subr.mxu0 0.0
  %138 = vmatpush2.msra.mxu0 0.0
  %139 = vmatprep.subr.mxu0 0.0
  %140 = vmatpush2.msra.mxu0 0.0
  %141 = vmatprep.subr.mxu0 0.0
  %142 = vmatpush2.msra.mxu0 0.0
  %143 = vmatprep.subr.mxu0 0.0
  %144 = vmatpush2.msra.mxu0 0.0
  %145 = vmatprep.subr.mxu0 0.0
  %146 = vmatpush2.msra.mxu0 0.0
  %147 = vmatprep.subr.mxu0 0.0
  %148 = vmatpush2.msra.mxu0 0.0
  %149 = vmatprep.subr.mxu0 0.0
  %150 = vmatpush2.msra.mxu0 0.0
  %151 = vmatprep.subr.mxu0 0.0
  %152 = vmatpush2.msra.mxu0 0.0
  %153 = vmatprep.subr.mxu0 0.0
  %154 = vmatpush2.msra.mxu0 0.0
  %155 = vmatprep.mubr.f32.mxu0 0.0
  %156 = vmatmul.mubr.f32.gmra.mxu0 %v80
  %v157 = vpop.f32.mrf.mxu0
  %v158 = vadd.f32 %v61, %v157
  %v159 = vpop.f32.mrf.mxu0
  %160 = vmatprep.mubr.f32.mxu0 0.0
  %161 = vmatmul.mubr.f32.gmra.mxu0 %v83
  %v162 = vpop.f32.mrf.mxu0
  %v163 = vadd.f32 %v66, %v162
  %v164 = vpop.f32.mrf.mxu0
  %165 = vmatprep.mubr.f32.mxu0 0.0
  %166 = vmatmul.mubr.f32.gmra.mxu0 %v86
  %v167 = vpop.f32.mrf.mxu0
  %v168 = vadd.f32 %v71, %v167
  %v169 = vpop.f32.mrf.mxu0
  %170 = vmatprep.mubr.f32.mxu0 0.0
  %171 = vmatmul.mubr.f32.gmra.mxu0 %v89
  %v172 = vpop.f32.mrf.mxu0
  %v173 = vadd.f32 %v76, %v172
  %v174 = vpop.f32.mrf.mxu0
  %175 = vdwg.mxu0
  %v176 = vmul.f32 %v158, 0.2
  %v177 = vmul.f32 %v163, 0.2
  %v178 = vmul.f32 %v168, 0.2
  %v179 = vmul.f32 %v173, 0.2
  %v180 = vmax.f32 %v158, %v176
  %v181 = vmax.f32 %v163, %v177
  %v182 = vmax.f32 %v168, %v178
  %v183 = vmax.f32 %v173, %v179
  %184 = vset.pattern.permute.xlu0 1
  %185 = vperm.xlu0 %184, %v54
  %v186 = vpop.permute.xlu0 %185
  %188 = vset.pattern.permute.xlu0 1
  %189 = vperm.xlu0 %188, %v55
  %v190 = vpop.permute.xlu0 %189
  %192 = vset.pattern.permute.xlu0 1
  %193 = vperm.xlu0 %192, %v56
  %v194 = vpop.permute.xlu0 %193
  %196 = vset.pattern.permute.xlu0 1
  %197 = vperm.xlu0 %196, %v57
  %v198 = vpop.permute.xlu0 %197
  %200 = vrot.lane.b32.xlu0 %v50, 96
  %v201 = vpop.permute.xlu0 %200
  %202 = vrot.lane.b32.xlu0 %v51, 96
  %v203 = vpop.permute.xlu0 %202
  %204 = vrot.lane.b32.xlu0 %v52, 96
  %v205 = vpop.permute.xlu0 %204
  %206 = vrot.lane.b32.xlu0 %v53, 96
  %v207 = vpop.permute.xlu0 %206
  %v208 = vsel %vm78, %v201, 0
  %v210 = vsel %vm78, %v203, 0
  %v212 = vsel %vm78, %v205, 0
  %v214 = vsel %vm78, %v207, 0
  %216 = vmatprep.subr.mxu0 0.0
  %217 = vmatpush1.msra.mxu0 0.0
  %218 = vmatprep.subr.mxu0 0.0
  %219 = vmatpush1.msra.mxu0 0.0
  %220 = vmatprep.subr.mxu0 0.0
  %221 = vmatpush1.msra.mxu0 0.0
  %222 = vmatprep.subr.mxu0 0.0
  %223 = vmatpush1.msra.mxu0 0.0
  %224 = vmatprep.subr.mxu0 0.0
  %225 = vmatpush1.msra.mxu0 0.0
  %226 = vmatprep.subr.mxu0 0.0
  %227 = vmatpush1.msra.mxu0 0.0
  %228 = vmatprep.subr.mxu0 0.0
  %229 = vmatpush1.msra.mxu0 0.0
  %230 = vmatprep.subr.mxu0 0.0
  %231 = vmatpush1.msra.mxu0 0.0
  %232 = vmatprep.subr.mxu0 0.0
  %233 = vmatpush1.msra.mxu0 0.0
  %234 = vmatprep.subr.mxu0 0.0
  %235 = vmatpush1.msra.mxu0 0.0
  %236 = vmatprep.subr.mxu0 0.0
  %237 = vmatpush1.msra.mxu0 0.0
  %238 = vmatprep.subr.mxu0 0.0
  %239 = vmatpush1.msra.mxu0 0.0
  %240 = vmatprep.subr.mxu0 0.0
  %241 = vmatpush1.msra.mxu0 %v183
  %242 = vmatprep.subr.mxu0 0.0
  %243 = vmatpush1.msra.mxu0 %v182
  %244 = vmatprep.subr.mxu0 0.0
  %245 = vmatpush1.msra.mxu0 %v181
  %246 = vmatprep.subr.mxu0 0.0
  %247 = vmatpush1.msra.mxu0 %v180
  %248 = vmatprep.subr.mxu0 0.0
  %249 = vmatpush2.msra.mxu0 0.0
  %250 = vmatprep.subr.mxu0 0.0
  %251 = vmatpush2.msra.mxu0 0.0
  %252 = vmatprep.subr.mxu0 0.0
  %253 = vmatpush2.msra.mxu0 0.0
  %254 = vmatprep.subr.mxu0 0.0
  %255 = vmatpush2.msra.mxu0 0.0
  %256 = vmatprep.subr.mxu0 0.0
  %257 = vmatpush2.msra.mxu0 0.0
  %258 = vmatprep.subr.mxu0 0.0
  %259 = vmatpush2.msra.mxu0 0.0
  %260 = vmatprep.subr.mxu0 0.0
  %261 = vmatpush2.msra.mxu0 0.0
  %262 = vmatprep.subr.mxu0 0.0
  %263 = vmatpush2.msra.mxu0 0.0
  %264 = vmatprep.subr.mxu0 0.0
  %265 = vmatpush2.msra.mxu0 0.0
  %266 = vmatprep.subr.mxu0 0.0
  %267 = vmatpush2.msra.mxu0 0.0
  %268 = vmatprep.subr.mxu0 0.0
  %269 = vmatpush2.msra.mxu0 0.0
  %270 = vmatprep.subr.mxu0 0.0
  %271 = vmatpush2.msra.mxu0 0.0
  %272 = vmatprep.subr.mxu0 0.0
  %273 = vmatpush2.msra.mxu0 0.0
  %274 = vmatprep.subr.mxu0 0.0
  %275 = vmatpush2.msra.mxu0 0.0
  %276 = vmatprep.subr.mxu0 0.0
  %277 = vmatpush2.msra.mxu0 0.0
  %278 = vmatprep.subr.mxu0 0.0
  %279 = vmatpush2.msra.mxu0 0.0
  %280 = vmatprep.mubr.f32.mxu0 0.0
  %281 = vmatmul.mubr.f32.gmra.mxu0 %v208
  %v282 = vpop.f32.mrf.mxu0
  %v283 = vadd.f32 %v186, %v282
  %v284 = vpop.f32.mrf.mxu0
  %285 = vmatprep.mubr.f32.mxu0 0.0
  %286 = vmatmul.mubr.f32.gmra.mxu0 %v210
  %v287 = vpop.f32.mrf.mxu0
  %v288 = vadd.f32 %v190, %v287
  %v289 = vpop.f32.mrf.mxu0
  %290 = vmatprep.mubr.f32.mxu0 0.0
  %291 = vmatmul.mubr.f32.gmra.mxu0 %v212
  %v292 = vpop.f32.mrf.mxu0
  %v293 = vadd.f32 %v194, %v292
  %v294 = vpop.f32.mrf.mxu0
  %295 = vmatprep.mubr.f32.mxu0 0.0
  %296 = vmatmul.mubr.f32.gmra.mxu0 %v214
  %v297 = vpop.f32.mrf.mxu0
  %v298 = vadd.f32 %v198, %v297
  %v299 = vpop.f32.mrf.mxu0
  %300 = vdwg.mxu0
  %v301 = vmul.f32 %v283, 0.2
  %v302 = vmul.f32 %v288, 0.2
  %v303 = vmul.f32 %v293, 0.2
  %v304 = vmul.f32 %v298, 0.2
  %v305 = vmax.f32 %v283, %v301
  %v306 = vmax.f32 %v288, %v302
  %v307 = vmax.f32 %v293, %v303
  %v308 = vmax.f32 %v298, %v304
  %309 = vset.pattern.permute.xlu0 2
  %310 = vperm.xlu0 %309, %v54
  %v311 = vpop.permute.xlu0 %310
  %313 = vset.pattern.permute.xlu0 2
  %314 = vperm.xlu0 %313, %v55
  %v315 = vpop.permute.xlu0 %314
  %317 = vset.pattern.permute.xlu0 2
  %318 = vperm.xlu0 %317, %v56
  %v319 = vpop.permute.xlu0 %318
  %321 = vset.pattern.permute.xlu0 2
  %322 = vperm.xlu0 %321, %v57
  %v323 = vpop.permute.xlu0 %322
  %325 = vrot.lane.b32.xlu0 %v50, 64
  %v326 = vpop.permute.xlu0 %325
  %327 = vrot.lane.b32.xlu0 %v51, 64
  %v328 = vpop.permute.xlu0 %327
  %329 = vrot.lane.b32.xlu0 %v52, 64
  %v330 = vpop.permute.xlu0 %329
  %331 = vrot.lane.b32.xlu0 %v53, 64
  %v332 = vpop.permute.xlu0 %331
  %v333 = vsel %vm78, %v326, 0
  %v335 = vsel %vm78, %v328, 0
  %v337 = vsel %vm78, %v330, 0
  %v339 = vsel %vm78, %v332, 0
  %341 = vmatprep.subr.mxu0 0.0
  %342 = vmatpush1.msra.mxu0 0.0
  %343 = vmatprep.subr.mxu0 0.0
  %344 = vmatpush1.msra.mxu0 0.0
  %345 = vmatprep.subr.mxu0 0.0
  %346 = vmatpush1.msra.mxu0 0.0
  %347 = vmatprep.subr.mxu0 0.0
  %348 = vmatpush1.msra.mxu0 0.0
  %349 = vmatprep.subr.mxu0 0.0
  %350 = vmatpush1.msra.mxu0 0.0
  %351 = vmatprep.subr.mxu0 0.0
  %352 = vmatpush1.msra.mxu0 0.0
  %353 = vmatprep.subr.mxu0 0.0
  %354 = vmatpush1.msra.mxu0 0.0
  %355 = vmatprep.subr.mxu0 0.0
  %356 = vmatpush1.msra.mxu0 0.0
  %357 = vmatprep.subr.mxu0 0.0
  %358 = vmatpush1.msra.mxu0 0.0
  %359 = vmatprep.subr.mxu0 0.0
  %360 = vmatpush1.msra.mxu0 0.0
  %361 = vmatprep.subr.mxu0 0.0
  %362 = vmatpush1.msra.mxu0 0.0
  %363 = vmatprep.subr.mxu0 0.0
  %364 = vmatpush1.msra.mxu0 0.0
  %365 = vmatprep.subr.mxu0 0.0
  %366 = vmatpush1.msra.mxu0 %v308
  %367 = vmatprep.subr.mxu0 0.0
  %368 = vmatpush1.msra.mxu0 %v307
  %369 = vmatprep.subr.mxu0 0.0
  %370 = vmatpush1.msra.mxu0 %v306
  %371 = vmatprep.subr.mxu0 0.0
  %372 = vmatpush1.msra.mxu0 %v305
  %373 = vmatprep.subr.mxu0 0.0
  %374 = vmatpush2.msra.mxu0 0.0
  %375 = vmatprep.subr.mxu0 0.0
  %376 = vmatpush2.msra.mxu0 0.0
  %377 = vmatprep.subr.mxu0 0.0
  %378 = vmatpush2.msra.mxu0 0.0
  %379 = vmatprep.subr.mxu0 0.0
  %380 = vmatpush2.msra.mxu0 0.0
  %381 = vmatprep.subr.mxu0 0.0
  %382 = vmatpush2.msra.mxu0 0.0
  %383 = vmatprep.subr.mxu0 0.0
  %384 = vmatpush2.msra.mxu0 0.0
  %385 = vmatprep.subr.mxu0 0.0
  %386 = vmatpush2.msra.mxu0 0.0
  %387 = vmatprep.subr.mxu0 0.0
  %388 = vmatpush2.msra.mxu0 0.0
  %389 = vmatprep.subr.mxu0 0.0
  %390 = vmatpush2.msra.mxu0 0.0
  %391 = vmatprep.subr.mxu0 0.0
  %392 = vmatpush2.msra.mxu0 0.0
  %393 = vmatprep.subr.mxu0 0.0
  %394 = vmatpush2.msra.mxu0 0.0
  %395 = vmatprep.subr.mxu0 0.0
  %396 = vmatpush2.msra.mxu0 0.0
  %397 = vmatprep.subr.mxu0 0.0
  %398 = vmatpush2.msra.mxu0 0.0
  %399 = vmatprep.subr.mxu0 0.0
  %400 = vmatpush2.msra.mxu0 0.0
  %401 = vmatprep.subr.mxu0 0.0
  %402 = vmatpush2.msra.mxu0 0.0
  %403 = vmatprep.subr.mxu0 0.0
  %404 = vmatpush2.msra.mxu0 0.0
  %405 = vmatprep.mubr.f32.mxu0 0.0
  %406 = vmatmul.mubr.f32.gmra.mxu0 %v333
  %v407 = vpop.f32.mrf.mxu0
  %v408 = vadd.f32 %v311, %v407
  %v409 = vpop.f32.mrf.mxu0
  %410 = vmatprep.mubr.f32.mxu0 0.0
  %411 = vmatmul.mubr.f32.gmra.mxu0 %v335
  %v412 = vpop.f32.mrf.mxu0
  %v413 = vadd.f32 %v315, %v412
  %v414 = vpop.f32.mrf.mxu0
  %415 = vmatprep.mubr.f32.mxu0 0.0
  %416 = vmatmul.mubr.f32.gmra.mxu0 %v337
  %v417 = vpop.f32.mrf.mxu0
  %v418 = vadd.f32 %v319, %v417
  %v419 = vpop.f32.mrf.mxu0
  %420 = vmatprep.mubr.f32.mxu0 0.0
  %421 = vmatmul.mubr.f32.gmra.mxu0 %v339
  %v422 = vpop.f32.mrf.mxu0
  %v423 = vadd.f32 %v323, %v422
  %v424 = vpop.f32.mrf.mxu0
  %425 = vdwg.mxu0
  %v426 = vmul.f32 %v408, 0.2
  %v427 = vmul.f32 %v413, 0.2
  %v428 = vmul.f32 %v418, 0.2
  %v429 = vmul.f32 %v423, 0.2
  %v430 = vmax.f32 %v408, %v426
  %v431 = vmax.f32 %v413, %v427
  %v432 = vmax.f32 %v418, %v428
  %v433 = vmax.f32 %v423, %v429
  %434 = vset.pattern.permute.xlu0 3
  %435 = vperm.xlu0 %434, %v54
  %v436 = vpop.permute.xlu0 %435
  %438 = vset.pattern.permute.xlu0 3
  %439 = vperm.xlu0 %438, %v55
  %v440 = vpop.permute.xlu0 %439
  %442 = vset.pattern.permute.xlu0 3
  %443 = vperm.xlu0 %442, %v56
  %v444 = vpop.permute.xlu0 %443
  %446 = vset.pattern.permute.xlu0 3
  %447 = vperm.xlu0 %446, %v57
  %v448 = vpop.permute.xlu0 %447
  %450 = vrot.lane.b32.xlu0 %v50, 32
  %v451 = vpop.permute.xlu0 %450
  %452 = vrot.lane.b32.xlu0 %v51, 32
  %v453 = vpop.permute.xlu0 %452
  %454 = vrot.lane.b32.xlu0 %v52, 32
  %v455 = vpop.permute.xlu0 %454
  %456 = vrot.lane.b32.xlu0 %v53, 32
  %v457 = vpop.permute.xlu0 %456
  %v458 = vsel %vm78, %v451, 0
  %v460 = vsel %vm78, %v453, 0
  %v462 = vsel %vm78, %v455, 0
  %v464 = vsel %vm78, %v457, 0
  %466 = vmatprep.subr.mxu0 0.0
  %467 = vmatpush1.msra.mxu0 0.0
  %468 = vmatprep.subr.mxu0 0.0
  %469 = vmatpush1.msra.mxu0 0.0
  %470 = vmatprep.subr.mxu0 0.0
  %471 = vmatpush1.msra.mxu0 0.0
  %472 = vmatprep.subr.mxu0 0.0
  %473 = vmatpush1.msra.mxu0 0.0
  %474 = vmatprep.subr.mxu0 0.0
  %475 = vmatpush1.msra.mxu0 0.0
  %476 = vmatprep.subr.mxu0 0.0
  %477 = vmatpush1.msra.mxu0 0.0
  %478 = vmatprep.subr.mxu0 0.0
  %479 = vmatpush1.msra.mxu0 0.0
  %480 = vmatprep.subr.mxu0 0.0
  %481 = vmatpush1.msra.mxu0 0.0
  %482 = vmatprep.subr.mxu0 0.0
  %483 = vmatpush1.msra.mxu0 0.0
  %484 = vmatprep.subr.mxu0 0.0
  %485 = vmatpush1.msra.mxu0 0.0
  %486 = vmatprep.subr.mxu0 0.0
  %487 = vmatpush1.msra.mxu0 0.0
  %488 = vmatprep.subr.mxu0 0.0
  %489 = vmatpush1.msra.mxu0 0.0
  %490 = vmatprep.subr.mxu0 0.0
  %491 = vmatpush1.msra.mxu0 %v433
  %492 = vmatprep.subr.mxu0 0.0
  %493 = vmatpush1.msra.mxu0 %v432
  %494 = vmatprep.subr.mxu0 0.0
  %495 = vmatpush1.msra.mxu0 %v431
  %496 = vmatprep.subr.mxu0 0.0
  %497 = vmatpush1.msra.mxu0 %v430
  %498 = vmatprep.subr.mxu0 0.0
  %499 = vmatpush2.msra.mxu0 0.0
  %500 = vmatprep.subr.mxu0 0.0
  %501 = vmatpush2.msra.mxu0 0.0
  %502 = vmatprep.subr.mxu0 0.0
  %503 = vmatpush2.msra.mxu0 0.0
  %504 = vmatprep.subr.mxu0 0.0
  %505 = vmatpush2.msra.mxu0 0.0
  %506 = vmatprep.subr.mxu0 0.0
  %507 = vmatpush2.msra.mxu0 0.0
  %508 = vmatprep.subr.mxu0 0.0
  %509 = vmatpush2.msra.mxu0 0.0
  %510 = vmatprep.subr.mxu0 0.0
  %511 = vmatpush2.msra.mxu0 0.0
  %512 = vmatprep.subr.mxu0 0.0
  %513 = vmatpush2.msra.mxu0 0.0
  %514 = vmatprep.subr.mxu0 0.0
  %515 = vmatpush2.msra.mxu0 0.0
  %516 = vmatprep.subr.mxu0 0.0
  %517 = vmatpush2.msra.mxu0 0.0
  %518 = vmatprep.subr.mxu0 0.0
  %519 = vmatpush2.msra.mxu0 0.0
  %520 = vmatprep.subr.mxu0 0.0
  %521 = vmatpush2.msra.mxu0 0.0
  %522 = vmatprep.subr.mxu0 0.0
  %523 = vmatpush2.msra.mxu0 0.0
  %524 = vmatprep.subr.mxu0 0.0
  %525 = vmatpush2.msra.mxu0 0.0
  %526 = vmatprep.subr.mxu0 0.0
  %527 = vmatpush2.msra.mxu0 0.0
  %528 = vmatprep.subr.mxu0 0.0
  %529 = vmatpush2.msra.mxu0 0.0
  %530 = vmatprep.mubr.f32.mxu0 0.0
  %531 = vmatmul.mubr.f32.gmra.mxu0 %v458
  %v532 = vpop.f32.mrf.mxu0
  %v533 = vadd.f32 %v436, %v532
  %v534 = vpop.f32.mrf.mxu0
  %535 = vmatprep.mubr.f32.mxu0 0.0
  %536 = vmatmul.mubr.f32.gmra.mxu0 %v460
  %v537 = vpop.f32.mrf.mxu0
  %v538 = vadd.f32 %v440, %v537
  %v539 = vpop.f32.mrf.mxu0
  %540 = vmatprep.mubr.f32.mxu0 0.0
  %541 = vmatmul.mubr.f32.gmra.mxu0 %v462
  %v542 = vpop.f32.mrf.mxu0
  %v543 = vadd.f32 %v444, %v542
  %v544 = vpop.f32.mrf.mxu0
  %545 = vmatprep.mubr.f32.mxu0 0.0
  %546 = vmatmul.mubr.f32.gmra.mxu0 %v464
  %v547 = vpop.f32.mrf.mxu0
  %v548 = vadd.f32 %v448, %v547
  %v549 = vpop.f32.mrf.mxu0
  %550 = vdwg.mxu0
  %v551 = vmul.f32 %v533, 0.2
  %v552 = vmul.f32 %v538, 0.2
  %v553 = vmul.f32 %v543, 0.2
  %v554 = vmul.f32 %v548, 0.2
  %v555 = vmax.f32 %v533, %v551
  %v556 = vmax.f32 %v538, %v552
  %v557 = vmax.f32 %v543, %v553
  %v558 = vmax.f32 %v548, %v554
  %v559 = vld [vmem:[%s1 + $0x8] sm:$0xff]
  %v560 = vld [vmem:[%s1 + $0x18] sm:$0xff]
  %v561 = vld [vmem:[%s1 + $0x28] sm:$0xff]
  %v562 = vld [vmem:[%s1 + $0x38] sm:$0xff]
  %563 = vset.pattern.permute.xlu0 4
  %564 = vperm.xlu0 %563, %v54
  %v565 = vpop.permute.xlu0 %564
  %567 = vset.pattern.permute.xlu0 4
  %568 = vperm.xlu0 %567, %v55
  %v569 = vpop.permute.xlu0 %568
  %571 = vset.pattern.permute.xlu0 4
  %572 = vperm.xlu0 %571, %v56
  %v573 = vpop.permute.xlu0 %572
  %575 = vset.pattern.permute.xlu0 4
  %576 = vperm.xlu0 %575, %v57
  %v577 = vpop.permute.xlu0 %576
  %v580 = vsel %vm78, %v559, 0
  %v583 = vsel %vm78, %v560, 0
  %v586 = vsel %vm78, %v561, 0
  %v589 = vsel %vm78, %v562, 0
  %591 = vmatprep.subr.mxu0 0.0
  %592 = vmatpush1.msra.mxu0 0.0
  %593 = vmatprep.subr.mxu0 0.0
  %594 = vmatpush1.msra.mxu0 0.0
  %595 = vmatprep.subr.mxu0 0.0
  %596 = vmatpush1.msra.mxu0 0.0
  %597 = vmatprep.subr.mxu0 0.0
  %598 = vmatpush1.msra.mxu0 0.0
  %599 = vmatprep.subr.mxu0 0.0
  %600 = vmatpush1.msra.mxu0 0.0
  %601 = vmatprep.subr.mxu0 0.0
  %602 = vmatpush1.msra.mxu0 0.0
  %603 = vmatprep.subr.mxu0 0.0
  %604 = vmatpush1.msra.mxu0 0.0
  %605 = vmatprep.subr.mxu0 0.0
  %606 = vmatpush1.msra.mxu0 0.0
  %607 = vmatprep.subr.mxu0 0.0
  %608 = vmatpush1.msra.mxu0 0.0
  %609 = vmatprep.subr.mxu0 0.0
  %610 = vmatpush1.msra.mxu0 0.0
  %611 = vmatprep.subr.mxu0 0.0
  %612 = vmatpush1.msra.mxu0 0.0
  %613 = vmatprep.subr.mxu0 0.0
  %614 = vmatpush1.msra.mxu0 0.0
  %615 = vmatprep.subr.mxu0 0.0
  %616 = vmatpush1.msra.mxu0 %v558
  %617 = vmatprep.subr.mxu0 0.0
  %618 = vmatpush1.msra.mxu0 %v557
  %619 = vmatprep.subr.mxu0 0.0
  %620 = vmatpush1.msra.mxu0 %v556
  %621 = vmatprep.subr.mxu0 0.0
  %622 = vmatpush1.msra.mxu0 %v555
  %623 = vmatprep.subr.mxu0 0.0
  %624 = vmatpush2.msra.mxu0 0.0
  %625 = vmatprep.subr.mxu0 0.0
  %626 = vmatpush2.msra.mxu0 0.0
  %627 = vmatprep.subr.mxu0 0.0
  %628 = vmatpush2.msra.mxu0 0.0
  %629 = vmatprep.subr.mxu0 0.0
  %630 = vmatpush2.msra.mxu0 0.0
  %631 = vmatprep.subr.mxu0 0.0
  %632 = vmatpush2.msra.mxu0 0.0
  %633 = vmatprep.subr.mxu0 0.0
  %634 = vmatpush2.msra.mxu0 0.0
  %635 = vmatprep.subr.mxu0 0.0
  %636 = vmatpush2.msra.mxu0 0.0
  %637 = vmatprep.subr.mxu0 0.0
  %638 = vmatpush2.msra.mxu0 0.0
  %639 = vmatprep.subr.mxu0 0.0
  %640 = vmatpush2.msra.mxu0 0.0
  %641 = vmatprep.subr.mxu0 0.0
  %642 = vmatpush2.msra.mxu0 0.0
  %643 = vmatprep.subr.mxu0 0.0
  %644 = vmatpush2.msra.mxu0 0.0
  %645 = vmatprep.subr.mxu0 0.0
  %646 = vmatpush2.msra.mxu0 0.0
  %647 = vmatprep.subr.mxu0 0.0
  %648 = vmatpush2.msra.mxu0 0.0
  %649 = vmatprep.subr.mxu0 0.0
  %650 = vmatpush2.msra.mxu0 0.0
  %651 = vmatprep.subr.mxu0 0.0
  %652 = vmatpush2.msra.mxu0 0.0
  %653 = vmatprep.subr.mxu0 0.0
  %654 = vmatpush2.msra.mxu0 0.0
  %655 = vmatprep.mubr.f32.mxu0 0.0
  %656 = vmatmul.mubr.f32.gmra.mxu0 %v580
  %v657 = vpop.f32.mrf.mxu0
  %v658 = vadd.f32 %v565, %v657
  %v659 = vpop.f32.mrf.mxu0
  %660 = vmatprep.mubr.f32.mxu0 0.0
  %661 = vmatmul.mubr.f32.gmra.mxu0 %v583
  %v662 = vpop.f32.mrf.mxu0
  %v663 = vadd.f32 %v569, %v662
  %v664 = vpop.f32.mrf.mxu0
  %665 = vmatprep.mubr.f32.mxu0 0.0
  %666 = vmatmul.mubr.f32.gmra.mxu0 %v586
  %v667 = vpop.f32.mrf.mxu0
  %v668 = vadd.f32 %v573, %v667
  %v669 = vpop.f32.mrf.mxu0
  %670 = vmatprep.mubr.f32.mxu0 0.0
  %671 = vmatmul.mubr.f32.gmra.mxu0 %v589
  %v672 = vpop.f32.mrf.mxu0
  %v673 = vadd.f32 %v577, %v672
  %v674 = vpop.f32.mrf.mxu0
  %675 = vdwg.mxu0
  %v676 = vmul.f32 %v658, 0.2
  %v677 = vmul.f32 %v663, 0.2
  %v678 = vmul.f32 %v668, 0.2
  %v679 = vmul.f32 %v673, 0.2
  %v680 = vmax.f32 %v658, %v676
  %v681 = vmax.f32 %v663, %v677
  %v682 = vmax.f32 %v668, %v678
  %v683 = vmax.f32 %v673, %v679
  %684 = vset.pattern.permute.xlu0 5
  %685 = vperm.xlu0 %684, %v54
  %v686 = vpop.permute.xlu0 %685
  %688 = vset.pattern.permute.xlu0 5
  %689 = vperm.xlu0 %688, %v55
  %v690 = vpop.permute.xlu0 %689
  %692 = vset.pattern.permute.xlu0 5
  %693 = vperm.xlu0 %692, %v56
  %v694 = vpop.permute.xlu0 %693
  %696 = vset.pattern.permute.xlu0 5
  %697 = vperm.xlu0 %696, %v57
  %v698 = vpop.permute.xlu0 %697
  %700 = vrot.lane.b32.xlu0 %v559, 96
  %v701 = vpop.permute.xlu0 %700
  %702 = vrot.lane.b32.xlu0 %v560, 96
  %v703 = vpop.permute.xlu0 %702
  %704 = vrot.lane.b32.xlu0 %v561, 96
  %v705 = vpop.permute.xlu0 %704
  %706 = vrot.lane.b32.xlu0 %v562, 96
  %v707 = vpop.permute.xlu0 %706
  %v708 = vsel %vm78, %v701, 0
  %v710 = vsel %vm78, %v703, 0
  %v712 = vsel %vm78, %v705, 0
  %v714 = vsel %vm78, %v707, 0
  %716 = vmatprep.subr.mxu0 0.0
  %717 = vmatpush1.msra.mxu0 0.0
  %718 = vmatprep.subr.mxu0 0.0
  %719 = vmatpush1.msra.mxu0 0.0
  %720 = vmatprep.subr.mxu0 0.0
  %721 = vmatpush1.msra.mxu0 0.0
  %722 = vmatprep.subr.mxu0 0.0
  %723 = vmatpush1.msra.mxu0 0.0
  %724 = vmatprep.subr.mxu0 0.0
  %725 = vmatpush1.msra.mxu0 0.0
  %726 = vmatprep.subr.mxu0 0.0
  %727 = vmatpush1.msra.mxu0 0.0
  %728 = vmatprep.subr.mxu0 0.0
  %729 = vmatpush1.msra.mxu0 0.0
  %730 = vmatprep.subr.mxu0 0.0
  %731 = vmatpush1.msra.mxu0 0.0
  %732 = vmatprep.subr.mxu0 0.0
  %733 = vmatpush1.msra.mxu0 0.0
  %734 = vmatprep.subr.mxu0 0.0
  %735 = vmatpush1.msra.mxu0 0.0
  %736 = vmatprep.subr.mxu0 0.0
  %737 = vmatpush1.msra.mxu0 0.0
  %738 = vmatprep.subr.mxu0 0.0
  %739 = vmatpush1.msra.mxu0 0.0
  %740 = vmatprep.subr.mxu0 0.0
  %741 = vmatpush1.msra.mxu0 %v683
  %742 = vmatprep.subr.mxu0 0.0
  %743 = vmatpush1.msra.mxu0 %v682
  %744 = vmatprep.subr.mxu0 0.0
  %745 = vmatpush1.msra.mxu0 %v681
  %746 = vmatprep.subr.mxu0 0.0
  %747 = vmatpush1.msra.mxu0 %v680
  %748 = vmatprep.subr.mxu0 0.0
  %749 = vmatpush2.msra.mxu0 0.0
  %750 = vmatprep.subr.mxu0 0.0
  %751 = vmatpush2.msra.mxu0 0.0
  %752 = vmatprep.subr.mxu0 0.0
  %753 = vmatpush2.msra.mxu0 0.0
  %754 = vmatprep.subr.mxu0 0.0
  %755 = vmatpush2.msra.mxu0 0.0
  %756 = vmatprep.subr.mxu0 0.0
  %757 = vmatpush2.msra.mxu0 0.0
  %758 = vmatprep.subr.mxu0 0.0
  %759 = vmatpush2.msra.mxu0 0.0
  %760 = vmatprep.subr.mxu0 0.0
  %761 = vmatpush2.msra.mxu0 0.0
  %762 = vmatprep.subr.mxu0 0.0
  %763 = vmatpush2.msra.mxu0 0.0
  %764 = vmatprep.subr.mxu0 0.0
  %765 = vmatpush2.msra.mxu0 0.0
  %766 = vmatprep.subr.mxu0 0.0
  %767 = vmatpush2.msra.mxu0 0.0
  %768 = vmatprep.subr.mxu0 0.0
  %769 = vmatpush2.msra.mxu0 0.0
  %770 = vmatprep.subr.mxu0 0.0
  %771 = vmatpush2.msra.mxu0 0.0
  %772 = vmatprep.subr.mxu0 0.0
  %773 = vmatpush2.msra.mxu0 0.0
  %774 = vmatprep.subr.mxu0 0.0
  %775 = vmatpush2.msra.mxu0 0.0
  %776 = vmatprep.subr.mxu0 0.0
  %777 = vmatpush2.msra.mxu0 0.0
  %778 = vmatprep.subr.mxu0 0.0
  %779 = vmatpush2.msra.mxu0 0.0
  %780 = vmatprep.mubr.f32.mxu0 0.0
  %781 = vmatmul.mubr.f32.gmra.mxu0 %v708
  %v782 = vpop.f32.mrf.mxu0
  %v783 = vadd.f32 %v686, %v782
  %v784 = vpop.f32.mrf.mxu0
  %785 = vmatprep.mubr.f32.mxu0 0.0
  %786 = vmatmul.mubr.f32.gmra.mxu0 %v710
  %v787 = vpop.f32.mrf.mxu0
  %v788 = vadd.f32 %v690, %v787
  %v789 = vpop.f32.mrf.mxu0
  %790 = vmatprep.mubr.f32.mxu0 0.0
  %791 = vmatmul.mubr.f32.gmra.mxu0 %v712
  %v792 = vpop.f32.mrf.mxu0
  %v793 = vadd.f32 %v694, %v792
  %v794 = vpop.f32.mrf.mxu0
  %795 = vmatprep.mubr.f32.mxu0 0.0
  %796 = vmatmul.mubr.f32.gmra.mxu0 %v714
  %v797 = vpop.f32.mrf.mxu0
  %v798 = vadd.f32 %v698, %v797
  %v799 = vpop.f32.mrf.mxu0
  %800 = vdwg.mxu0
  %v801 = vmul.f32 %v783, 0.2
  %v802 = vmul.f32 %v788, 0.2
  %v803 = vmul.f32 %v793, 0.2
  %v804 = vmul.f32 %v798, 0.2
  %v805 = vmax.f32 %v783, %v801
  %v806 = vmax.f32 %v788, %v802
  %v807 = vmax.f32 %v793, %v803
  %v808 = vmax.f32 %v798, %v804
  %809 = vset.pattern.permute.xlu0 6
  %810 = vperm.xlu0 %809, %v54
  %v811 = vpop.permute.xlu0 %810
  %813 = vset.pattern.permute.xlu0 6
  %814 = vperm.xlu0 %813, %v55
  %v815 = vpop.permute.xlu0 %814
  %817 = vset.pattern.permute.xlu0 6
  %818 = vperm.xlu0 %817, %v56
  %v819 = vpop.permute.xlu0 %818
  %821 = vset.pattern.permute.xlu0 6
  %822 = vperm.xlu0 %821, %v57
  %v823 = vpop.permute.xlu0 %822
  %825 = vrot.lane.b32.xlu0 %v559, 64
  %v826 = vpop.permute.xlu0 %825
  %827 = vrot.lane.b32.xlu0 %v560, 64
  %v828 = vpop.permute.xlu0 %827
  %829 = vrot.lane.b32.xlu0 %v561, 64
  %v830 = vpop.permute.xlu0 %829
  %831 = vrot.lane.b32.xlu0 %v562, 64
  %v832 = vpop.permute.xlu0 %831
  %v833 = vsel %vm78, %v826, 0
  %v835 = vsel %vm78, %v828, 0
  %v837 = vsel %vm78, %v830, 0
  %v839 = vsel %vm78, %v832, 0
  %841 = vmatprep.subr.mxu0 0.0
  %842 = vmatpush1.msra.mxu0 0.0
  %843 = vmatprep.subr.mxu0 0.0
  %844 = vmatpush1.msra.mxu0 0.0
  %845 = vmatprep.subr.mxu0 0.0
  %846 = vmatpush1.msra.mxu0 0.0
  %847 = vmatprep.subr.mxu0 0.0
  %848 = vmatpush1.msra.mxu0 0.0
  %849 = vmatprep.subr.mxu0 0.0
  %850 = vmatpush1.msra.mxu0 0.0
  %851 = vmatprep.subr.mxu0 0.0
  %852 = vmatpush1.msra.mxu0 0.0
  %853 = vmatprep.subr.mxu0 0.0
  %854 = vmatpush1.msra.mxu0 0.0
  %855 = vmatprep.subr.mxu0 0.0
  %856 = vmatpush1.msra.mxu0 0.0
  %857 = vmatprep.subr.mxu0 0.0
  %858 = vmatpush1.msra.mxu0 0.0
  %859 = vmatprep.subr.mxu0 0.0
  %860 = vmatpush1.msra.mxu0 0.0
  %861 = vmatprep.subr.mxu0 0.0
  %862 = vmatpush1.msra.mxu0 0.0
  %863 = vmatprep.subr.mxu0 0.0
  %864 = vmatpush1.msra.mxu0 0.0
  %865 = vmatprep.subr.mxu0 0.0
  %866 = vmatpush1.msra.mxu0 %v808
  %867 = vmatprep.subr.mxu0 0.0
  %868 = vmatpush1.msra.mxu0 %v807
  %869 = vmatprep.subr.mxu0 0.0
  %870 = vmatpush1.msra.mxu0 %v806
  %871 = vmatprep.subr.mxu0 0.0
  %872 = vmatpush1.msra.mxu0 %v805
  %873 = vmatprep.subr.mxu0 0.0
  %874 = vmatpush2.msra.mxu0 0.0
  %875 = vmatprep.subr.mxu0 0.0
  %876 = vmatpush2.msra.mxu0 0.0
  %877 = vmatprep.subr.mxu0 0.0
  %878 = vmatpush2.msra.mxu0 0.0
  %879 = vmatprep.subr.mxu0 0.0
  %880 = vmatpush2.msra.mxu0 0.0
  %881 = vmatprep.subr.mxu0 0.0
  %882 = vmatpush2.msra.mxu0 0.0
  %883 = vmatprep.subr.mxu0 0.0
  %884 = vmatpush2.msra.mxu0 0.0
  %885 = vmatprep.subr.mxu0 0.0
  %886 = vmatpush2.msra.mxu0 0.0
  %887 = vmatprep.subr.mxu0 0.0
  %888 = vmatpush2.msra.mxu0 0.0
  %889 = vmatprep.subr.mxu0 0.0
  %890 = vmatpush2.msra.mxu0 0.0
  %891 = vmatprep.subr.mxu0 0.0
  %892 = vmatpush2.msra.mxu0 0.0
  %893 = vmatprep.subr.mxu0 0.0
  %894 = vmatpush2.msra.mxu0 0.0
  %895 = vmatprep.subr.mxu0 0.0
  %896 = vmatpush2.msra.mxu0 0.0
  %897 = vmatprep.subr.mxu0 0.0
  %898 = vmatpush2.msra.mxu0 0.0
  %899 = vmatprep.subr.mxu0 0.0
  %900 = vmatpush2.msra.mxu0 0.0
  %901 = vmatprep.subr.mxu0 0.0
  %902 = vmatpush2.msra.mxu0 0.0
  %903 = vmatprep.subr.mxu0 0.0
  %904 = vmatpush2.msra.mxu0 0.0
  %905 = vmatprep.mubr.f32.mxu0 0.0
  %906 = vmatmul.mubr.f32.gmra.mxu0 %v833
  %v907 = vpop.f32.mrf.mxu0
  %v908 = vadd.f32 %v811, %v907
  %v909 = vpop.f32.mrf.mxu0
  %910 = vmatprep.mubr.f32.mxu0 0.0
  %911 = vmatmul.mubr.f32.gmra.mxu0 %v835
  %v912 = vpop.f32.mrf.mxu0
  %v913 = vadd.f32 %v815, %v912
  %v914 = vpop.f32.mrf.mxu0
  %915 = vmatprep.mubr.f32.mxu0 0.0
  %916 = vmatmul.mubr.f32.gmra.mxu0 %v837
  %v917 = vpop.f32.mrf.mxu0
  %v918 = vadd.f32 %v819, %v917
  %v919 = vpop.f32.mrf.mxu0
  %920 = vmatprep.mubr.f32.mxu0 0.0
  %921 = vmatmul.mubr.f32.gmra.mxu0 %v839
  %v922 = vpop.f32.mrf.mxu0
  %v923 = vadd.f32 %v823, %v922
  %v924 = vpop.f32.mrf.mxu0
  %925 = vdwg.mxu0
  %v926 = vmul.f32 %v908, 0.2
  %v927 = vmul.f32 %v913, 0.2
  %v928 = vmul.f32 %v918, 0.2
  %v929 = vmul.f32 %v923, 0.2
  %v930 = vmax.f32 %v908, %v926
  %v931 = vmax.f32 %v913, %v927
  %v932 = vmax.f32 %v918, %v928
  %v933 = vmax.f32 %v923, %v929
  %v934 = vld [vmem:[%s3] sm:$0xff]
  %v935 = vld [vmem:[%s3 + $0x8] sm:$0xff]
  %v936 = vld [vmem:[%s3 + $0x10] sm:$0xff]
  %v937 = vld [vmem:[%s3 + $0x18] sm:$0xff]
  %v938 = vld [vmem:[%s4] sm:$0xff]
  %v939 = vld [vmem:[%s4 + $0x8] sm:$0xff]
  %v940 = vld [vmem:[%s4 + $0x10] sm:$0xff]
  %v941 = vld [vmem:[%s4 + $0x18] sm:$0xff]
  %943 = vset.pattern.permute.xlu0 0
  %944 = vperm.xlu0 %943, %v938
  %v945 = vpop.permute.xlu0 %944
  %948 = vset.pattern.permute.xlu0 0
  %949 = vperm.xlu0 %948, %v939
  %v950 = vpop.permute.xlu0 %949
  %953 = vset.pattern.permute.xlu0 0
  %954 = vperm.xlu0 %953, %v940
  %v955 = vpop.permute.xlu0 %954
  %958 = vset.pattern.permute.xlu0 0
  %959 = vperm.xlu0 %958, %v941
  %v960 = vpop.permute.xlu0 %959
  %v963 = vsel %vm78, %v934, 0
  %v966 = vsel %vm78, %v935, 0
  %v969 = vsel %vm78, %v936, 0
  %v972 = vsel %vm78, %v937, 0
  %974 = vmatprep.subr.mxu0 0.0
  %975 = vmatpush1.msra.mxu0 0.0
  %976 = vmatprep.subr.mxu0 0.0
  %977 = vmatpush1.msra.mxu0 0.0
  %978 = vmatprep.subr.mxu0 0.0
  %979 = vmatpush1.msra.mxu0 0.0
  %980 = vmatprep.subr.mxu0 0.0
  %981 = vmatpush1.msra.mxu0 0.0
  %982 = vmatprep.subr.mxu0 0.0
  %983 = vmatpush1.msra.mxu0 0.0
  %984 = vmatprep.subr.mxu0 0.0
  %985 = vmatpush1.msra.mxu0 0.0
  %986 = vmatprep.subr.mxu0 0.0
  %987 = vmatpush1.msra.mxu0 0.0
  %988 = vmatprep.subr.mxu0 0.0
  %989 = vmatpush1.msra.mxu0 0.0
  %990 = vmatprep.subr.mxu0 0.0
  %991 = vmatpush1.msra.mxu0 0.0
  %992 = vmatprep.subr.mxu0 0.0
  %993 = vmatpush1.msra.mxu0 0.0
  %994 = vmatprep.subr.mxu0 0.0
  %995 = vmatpush1.msra.mxu0 0.0
  %996 = vmatprep.subr.mxu0 0.0
  %997 = vmatpush1.msra.mxu0 0.0
  %998 = vmatprep.subr.mxu0 0.0
  %999 = vmatpush1.msra.mxu0 %v933
  %1000 = vmatprep.subr.mxu0 0.0
  %1001 = vmatpush1.msra.mxu0 %v932
  %1002 = vmatprep.subr.mxu0 0.0
  %1003 = vmatpush1.msra.mxu0 %v931
  %1004 = vmatprep.subr.mxu0 0.0
  %1005 = vmatpush1.msra.mxu0 %v930
  %1006 = vmatprep.subr.mxu0 0.0
  %1007 = vmatpush2.msra.mxu0 0.0
  %1008 = vmatprep.subr.mxu0 0.0
  %1009 = vmatpush2.msra.mxu0 0.0
  %1010 = vmatprep.subr.mxu0 0.0
  %1011 = vmatpush2.msra.mxu0 0.0
  %1012 = vmatprep.subr.mxu0 0.0
  %1013 = vmatpush2.msra.mxu0 0.0
  %1014 = vmatprep.subr.mxu0 0.0
  %1015 = vmatpush2.msra.mxu0 0.0
  %1016 = vmatprep.subr.mxu0 0.0
  %1017 = vmatpush2.msra.mxu0 0.0
  %1018 = vmatprep.subr.mxu0 0.0
  %1019 = vmatpush2.msra.mxu0 0.0
  %1020 = vmatprep.subr.mxu0 0.0
  %1021 = vmatpush2.msra.mxu0 0.0
  %1022 = vmatprep.subr.mxu0 0.0
  %1023 = vmatpush2.msra.mxu0 0.0
  %1024 = vmatprep.subr.mxu0 0.0
  %1025 = vmatpush2.msra.mxu0 0.0
  %1026 = vmatprep.subr.mxu0 0.0
  %1027 = vmatpush2.msra.mxu0 0.0
  %1028 = vmatprep.subr.mxu0 0.0
  %1029 = vmatpush2.msra.mxu0 0.0
  %1030 = vmatprep.subr.mxu0 0.0
  %1031 = vmatpush2.msra.mxu0 0.0
  %1032 = vmatprep.subr.mxu0 0.0
  %1033 = vmatpush2.msra.mxu0 0.0
  %1034 = vmatprep.subr.mxu0 0.0
  %1035 = vmatpush2.msra.mxu0 0.0
  %1036 = vmatprep.subr.mxu0 0.0
  %1037 = vmatpush2.msra.mxu0 0.0
  %1038 = vmatprep.mubr.f32.mxu0 0.0
  %1039 = vmatmul.mubr.f32.gmra.mxu0 %v963
  %v1040 = vpop.f32.mrf.mxu0
  %v1041 = vadd.f32 %v945, %v1040
  %v1042 = vpop.f32.mrf.mxu0
  %1043 = vmatprep.mubr.f32.mxu0 0.0
  %1044 = vmatmul.mubr.f32.gmra.mxu0 %v966
  %v1045 = vpop.f32.mrf.mxu0
  %v1046 = vadd.f32 %v950, %v1045
  %v1047 = vpop.f32.mrf.mxu0
  %1048 = vmatprep.mubr.f32.mxu0 0.0
  %1049 = vmatmul.mubr.f32.gmra.mxu0 %v969
  %v1050 = vpop.f32.mrf.mxu0
  %v1051 = vadd.f32 %v955, %v1050
  %v1052 = vpop.f32.mrf.mxu0
  %1053 = vmatprep.mubr.f32.mxu0 0.0
  %1054 = vmatmul.mubr.f32.gmra.mxu0 %v972
  %v1055 = vpop.f32.mrf.mxu0
  %v1056 = vadd.f32 %v960, %v1055
  %v1057 = vpop.f32.mrf.mxu0
  %1058 = vdwg.mxu0
  %1059 = vst.msk [vmem:[%s5] sm:$0xff] %vm28, %v1041
  %1060 = vst.msk [vmem:[%s5 + $0x8] sm:$0xff] %vm28, %v1046
  %1061 = vst.msk [vmem:[%s5 + $0x10] sm:$0xff] %vm28, %v1051
  %1062 = vst.msk [vmem:[%s5 + $0x18] sm:$0xff] %vm28, %v1056
  // Predicated region
  $region22: #{tpu_custom_call.1} parent=0 // pred_check
    _
  $region23: #{tpu_custom_call.1} parent=0 // pred_check_branch
    %1064 = sbr.rel (0) target = $region25
  $region24: #{tpu_custom_call.1} parent=0 // pred_region
    _
  $region25: #{tpu_custom_call.1} parent=0 // pred_fallthru
    _
  // Predicated region
  $region26: #{tpu_custom_call.1} parent=0 // pred_check
    _
  $region27: #{tpu_custom_call.1} parent=0 // pred_check_branch
    %1066 = sbr.rel (0) target = $region29
  $region28: #{tpu_custom_call.1} parent=0 // pred_region
    _
  $region29: #{tpu_custom_call.1} parent=0 // pred_fallthru
    _

</llo_original>
